<compile_context>
chip_gen: v7x
topology: tpu7x:2x2x1
jax: 0.10.0
libtpu: 0.0.40
codegen_flags: <defaults>
</compile_context>

<pallas_src>
import jax
import jax.numpy as jnp
from jax.experimental import pallas as pl
from jax.experimental.pallas import tpu as pltpu


def _round_up(x, m):
    return (x + m - 1) // m * m


def _pick_tile(dim, cap, quantum):
    """Choose a tile for `dim`: (tile, padded_dim).

    Full extent when it fits under `cap` (full-extent blocks are exempt from the (8,128)
    divisibility rule -> no padding needed); otherwise the largest multiple of `quantum`
    <= cap, padding `dim` up only in that rare case.
    """
    if dim <= cap:
        return dim, dim
    t = max(quantum, cap // quantum * quantum)
    return t, _round_up(dim, t)


def _conv1x1_kernel(w_ref, x_ref, b_ref, o_ref):
    """One (t_og, tp) NCHW output tile:  bf16 [t_og, K] @ bf16 [K, tp] -> f32, + bias.

    K is a single full-extent block (no reduction grid axis), so there is no accumulator
    scratch, no per-k output RMW and no init branch: compute once, store once.
    """
    acc = jnp.dot(w_ref[...],                       # bf16 [t_og, K]
                  x_ref[...].astype(jnp.bfloat16),  # f32 -> bf16 cast in-register
                  preferred_element_type=jnp.float32)
    o_ref[...] = acc + b_ref[...]                   # fused f32 bias epilogue


def conv1x1_nchw(x, weight, bias=None, *, stride=1, groups=1):
    """PyTorch-semantics 1x1 convolution (padding=0).

    x:      [N, Cin, H, W]  float32
    weight: [O, Cin//groups, 1, 1]
    bias:   [O] or None
    returns [N, O, OH, OW]  float32
    """
    N, Cin, H, W = x.shape
    O, K, kh, kw = weight.shape
    assert kh == 1 and kw == 1
    assert Cin == K * groups and O % groups == 0
    Og = O // groups

    # 1x1 conv with padding=0: spatial subsample (only if stride > 1) + grouped matmul.
    xs = x if stride == 1 else x[:, :, ::stride, ::stride]
    OH, OW = xs.shape[2], xs.shape[3]
    P = OH * OW

    # Free reshapes (NCHW is contiguous in exactly this order): no HBM re-layout pass.
    x_r = xs.reshape(N, groups, K, P)                         # [N, G, K, P]   (f32)
    w_r = weight.reshape(groups, Og, K).astype(jnp.bfloat16)  # [G, Og, K]     (bf16)
    if bias is None:
        b_r = jnp.zeros((groups, Og, 1), jnp.float32)
    else:
        b_r = bias.reshape(groups, Og, 1).astype(jnp.float32)

    LANE, SUB = 128, 8
    xb = jnp.dtype(x_r.dtype).itemsize

    # Lane (spatial) tile: full P when it fits, else big lane-dense tiles.
    #   budget: double-buffered f32 x-tile (K * tp * 4) <= ~4 MiB per buffer.
    tp_cap = max(LANE, min(2048, (4 * 1024 * 1024) // max(K * xb, 1) // LANE * LANE))
    tp, Pp = _pick_tile(P, tp_cap, LANE)

    # Sublane (output-channel) tile: bounded by bf16 weight tile and f32 output tile.
    cap_w = (3 * 1024 * 1024) // max(K * 2, 1)
    cap_o = (3 * 1024 * 1024) // max(tp * 4, 1)
    tog_cap = max(SUB, min(2048, cap_w, cap_o) // SUB * SUB)
    t_og, Ogp = _pick_tile(Og, tog_cap, SUB)

    # v7x has 2 TensorCores: make sure there are >= 2 parallel grid tiles when possible.
    if N * groups * (Ogp // t_og) * (Pp // tp) == 1:
        if Pp >= 2 * LANE and Pp % (2 * LANE) == 0:
            tp = Pp // 2
        elif Ogp >= 2 * SUB and Ogp % (2 * SUB) == 0:
            t_og = Ogp // 2

    # Rare padding fallbacks (only when a dim exceeds its cap and is not tile-divisible).
    x_in = x_r if Pp == P else (
        jnp.zeros((N, groups, K, Pp), x_r.dtype).at[..., :P].set(x_r))
    if Ogp == Og:
        w_in, b_in = w_r, b_r
    else:
        w_in = jnp.zeros((groups, Ogp, K), jnp.bfloat16).at[:, :Og, :].set(w_r)
        b_in = jnp.zeros((groups, Ogp, 1), jnp.float32).at[:, :Og, :].set(b_r)

    grid = (N, groups, Ogp // t_og, Pp // tp)

    out = pl.pallas_call(
        _conv1x1_kernel,
        out_shape=jax.ShapeDtypeStruct((N, groups, Ogp, Pp), jnp.float32),
        grid_spec=pltpu.PrefetchScalarGridSpec(
            num_scalar_prefetch=0,
            grid=grid,
            in_specs=[
                # Weight tile: constant across the innermost spatial axis -> DMA'd once
                # per (n, g, i), not once per output tile.
                pl.BlockSpec((None, t_og, K), lambda n, g, i, j: (g, i, 0)),
                # Activation tile: full-extent K (no 128-padding of K in HBM); each
                # spatial tile is read exactly once when t_og == Og (the common case).
                pl.BlockSpec((None, None, K, tp), lambda n, g, i, j: (n, g, 0, j)),
                # Bias column, broadcast along lanes inside the kernel.
                pl.BlockSpec((None, t_og, 1), lambda n, g, i, j: (g, i, 0)),
            ],
            out_specs=pl.BlockSpec((None, None, t_og, tp),
                                   lambda n, g, i, j: (n, g, i, j)),
        ),
        compiler_params=pltpu.CompilerParams(
            # No reduction axis -> every grid axis is independent (megacore-shardable).
            dimension_semantics=("parallel", "parallel", "parallel", "parallel"),
            vmem_limit_bytes=32 * 1024 * 1024,
        ),
    )(w_in, x_in, b_in)

    if Ogp != Og or Pp != P:
        out = out[:, :, :Og, :P]
    # Output tiles are already NCHW-ordered: this reshape is free.
    return out.reshape(N, O, OH, OW)


conv1x1 = jax.jit(conv1x1_nchw, static_argnames=("stride", "groups"))


def _conv1x1_ref(x, weight, bias, stride, groups):
    """Pure-jnp reference with the same bf16-operand / f32-accumulate numerics."""
    xs = x[:, :, ::stride, ::stride].astype(jnp.bfloat16)
    N, Cin, OH, OW = xs.shape
    O, K, _, _ = weight.shape
    Og = O // groups
    xg = xs.reshape(N, groups, K, OH, OW)
    wg = weight.astype(jnp.bfloat16).reshape(groups, Og, K)
    out = jnp.einsum("ngchw,goc->ngohw", xg, wg,
                     preferred_element_type=jnp.float32).reshape(N, O, OH, OW)
    if bias is not None:
        out = out + bias.astype(jnp.float32).reshape(1, O, 1, 1)
    return out


if __name__ == "__main__":
    key = jax.random.PRNGKey(0)
    k1, k2, k3, k4, k5 = jax.random.split(key, 5)

    # Case 1: module defaults -- Conv1x1(in_channels=3, out_channels=64,
    #                                    stride=1, groups=1, bias=False)
    x1 = jax.random.normal(k1, (2, 3, 16, 16), jnp.float32)
    w1 = (2.0 / 3.0) ** 0.5 * jax.random.normal(k2, (64, 3, 1, 1), jnp.float32)
    y1 = jax.block_until_ready(conv1x1(x1, w1, None, stride=1, groups=1))
    assert y1.shape == (2, 64, 16, 16)
    assert bool(jnp.all(jnp.isfinite(y1)))
    r1 = _conv1x1_ref(x1, w1, None, 1, 1)
    assert bool(jnp.allclose(y1, r1, rtol=1e-2, atol=1e-2))

    # Case 2: exercise the constructor's stride / groups / bias options
    # (groups is a parallel grid axis -- one pallas_call, no Python group loop).
    x2 = jax.random.normal(k3, (2, 8, 16, 16), jnp.float32)
    w2 = 0.5 * jax.random.normal(k4, (64, 4, 1, 1), jnp.float32)
    b2 = 0.1 * jax.random.normal(k5, (64,), jnp.float32)
    y2 = jax.block_until_ready(conv1x1(x2, w2, b2, stride=2, groups=2))
    assert y2.shape == (2, 64, 8, 8)
    assert bool(jnp.all(jnp.isfinite(y2)))
    r2 = _conv1x1_ref(x2, w2, b2, 2, 2)
    assert bool(jnp.allclose(y2, r2, rtol=1e-2, atol=1e-2))

    print("KERNEL_OK")
</pallas_src>

<mosaic_0001>
module attributes {stable_mosaic.version = 11 : i64} {
  func.func @_conv1x1_kernel(%arg0: i32, %arg1: i32, %arg2: i32, %arg3: i32, %arg4: memref<1x64x3xbf16, #tpu.memory_space<vmem>>, %arg5: memref<1x1x3x256xf32, #tpu.memory_space<vmem>>, %arg6: memref<1x64x1xf32, #tpu.memory_space<vmem>>, %arg7: memref<1x1x64x256xf32, #tpu.memory_space<vmem>>) attributes {dimension_semantics = [#tpu.dimension_semantics<parallel>, #tpu.dimension_semantics<parallel>, #tpu.dimension_semantics<parallel>, #tpu.dimension_semantics<parallel>], iteration_bounds = array<i64: 2, 1, 1, 1>, scalar_prefetch = 0 : i64, scratch_operands = 0 : i64, tpu.core_type = #tpu.core_type<tc>, window_params = [{transform_indices = @transform_0, window_bounds = array<i64: 1, 64, 3>}, {transform_indices = @transform_1, window_bounds = array<i64: 1, 1, 3, 256>}, {transform_indices = @transform_2, window_bounds = array<i64: 1, 64, 1>}, {transform_indices = @transform_3, window_bounds = array<i64: 1, 1, 64, 256>}]} {
    %c0 = arith.constant 0 : index
    %c0_0 = arith.constant 0 : index
    %c0_1 = arith.constant 0 : index
    %0 = vector.load %arg4[%c0, %c0_0, %c0_1] : memref<1x64x3xbf16, #tpu.memory_space<vmem>>, vector<1x64x3xbf16>
    %1 = vector.shape_cast %0 : vector<1x64x3xbf16> to vector<64x3xbf16>
    %c0_2 = arith.constant 0 : index
    %c0_3 = arith.constant 0 : index
    %c0_4 = arith.constant 0 : index
    %c0_5 = arith.constant 0 : index
    %2 = vector.load %arg5[%c0_2, %c0_3, %c0_4, %c0_5] : memref<1x1x3x256xf32, #tpu.memory_space<vmem>>, vector<1x1x3x256xf32>
    %3 = vector.shape_cast %2 : vector<1x1x3x256xf32> to vector<3x256xf32>
    %4 = arith.truncf %3 : vector<3x256xf32> to vector<3x256xbf16>
    %cst = arith.constant dense<0.000000e+00> : vector<64x256xf32>
    %5 = tpu.matmul %1, %4, %cst {dimension_numbers = #tpu.dot_dimension_numbers<[1], [0], [0], [1], [0, 0, 1, 1], [], []>} : vector<64x3xbf16>, vector<3x256xbf16>, vector<64x256xf32> -> vector<64x256xf32>
    %c0_6 = arith.constant 0 : index
    %c0_7 = arith.constant 0 : index
    %c0_8 = arith.constant 0 : index
    %6 = vector.load %arg6[%c0_6, %c0_7, %c0_8] : memref<1x64x1xf32, #tpu.memory_space<vmem>>, vector<1x64x1xf32>
    %7 = vector.shape_cast %6 : vector<1x64x1xf32> to vector<64x1xf32>
    %8 = vector.broadcast %7 : vector<64x1xf32> to vector<64x256xf32>
    %9 = arith.addf %5, %8 : vector<64x256xf32>
    %c0_9 = arith.constant 0 : index
    %c0_10 = arith.constant 0 : index
    %c0_11 = arith.constant 0 : index
    %c0_12 = arith.constant 0 : index
    %10 = vector.load %arg7[%c0_9, %c0_10, %c0_11, %c0_12] : memref<1x1x64x256xf32, #tpu.memory_space<vmem>>, vector<1x1x64x256xf32>
    %11 = vector.shape_cast %10 : vector<1x1x64x256xf32> to vector<64x256xf32>
    %12 = vector.shape_cast %9 : vector<64x256xf32> to vector<1x1x64x256xf32>
    tpu.vector_store %arg7[%c0_9, %c0_10, %c0_11, %c0_12], %12 {strides = array<i32>} : memref<1x1x64x256xf32, #tpu.memory_space<vmem>>, vector<1x1x64x256xf32>,
    return
  }
  func.func @transform_0(%arg0: i32, %arg1: i32, %arg2: i32, %arg3: i32) -> (i32, i32, i32) {
    %c0_i32 = arith.constant 0 : i32
    %c0_i32_0 = arith.constant 0 : i32
    return %arg1, %arg2, %c0_i32 : i32, i32, i32
  }
  func.func @transform_1(%arg0: i32, %arg1: i32, %arg2: i32, %arg3: i32) -> (i32, i32, i32, i32) {
    %c0_i32 = arith.constant 0 : i32
    %c0_i32_0 = arith.constant 0 : i32
    return %arg0, %arg1, %c0_i32, %arg3 : i32, i32, i32, i32
  }
  func.func @transform_2(%arg0: i32, %arg1: i32, %arg2: i32, %arg3: i32) -> (i32, i32, i32) {
    %c0_i32 = arith.constant 0 : i32
    %c0_i32_0 = arith.constant 0 : i32
    return %arg1, %arg2, %c0_i32 : i32, i32, i32
  }
  func.func @transform_3(%arg0: i32, %arg1: i32, %arg2: i32, %arg3: i32) -> (i32, i32, i32, i32) {
    %c0_i32 = arith.constant 0 : i32
    return %arg0, %arg1, %arg2, %arg3 : i32, i32, i32, i32
  }
}

</mosaic_0001>

<llo_original>
// kernel: conv1x1_nchw.1
$region0: #{conv1x1_nchw.1}
  #allocation0 [shape = 'u32[]', space=smem, size = 0x4, offset = 0x4, fixed_abs, tag = 'smem constant byte address 0x4 - core index']
  #allocation1 [shape = 'u32[144,128]{1,0:T(1,128)}', space=vmem, size = 0x12000, scoped, tag = 'internal scratch']
  %s0 = inlined_call_operand.vmem [shape: bf16[1,64,3], index: 0, kind: input, shape index: {}]
  %s1 = inlined_call_operand.vmem [shape: f32[2,1,3,256], index: 1, kind: input, shape index: {}]
  %s2 = inlined_call_operand.vmem [shape: f32[1,64,1], index: 2, kind: input, shape index: {}]
  %s3 = inlined_call_operand.vmem [shape: f32[2,1,64,256], index: 3, kind: output, shape index: {}]
  %s4 = sld [smem:[#allocation0]]
  $region45: #{conv1x1_nchw.1} parent=0
    _
  %s6 = ssub.s32 1, %s4
  %s7 = scalar_select 0, %s6, %s4
  loop: start=0, step=1, limit=4
  $region2: #{conv1x1_nchw.1} parent=0 // loop_pre_header
    _
  $region3: #{conv1x1_nchw.1} parent=0 // loop_header
    %s9 = sphi 0, %s13
    %p10 = scmp.ge.s32.totalorder %s9, 4
    %s16 = sphi 0, %s42
    %s17 = sphi 0, %s38
    %s18 = sphi 0, %s34
    %s19 = sphi 0, %s30
    %s20 = sphi 0, %s16
    %s21 = sphi 0, %s17
    %s22 = sphi 0, %s18
    %s23 = sphi 0, %s19
    %s24 = sphi 0, %s20
    %s25 = sphi 0, %s21
    %s26 = sphi 0, %s22
    %s27 = sphi 0, %s23
    %s47 = sphi 0, %s49
    %s50 = sphi 0, %s47
    %s51 = sphi 0, %s50
    %s67 = sphi 0, %s51
    %s77 = sphi 0, %s79
    %s80 = sphi 0, %s77
    %s81 = sphi 0, %s80
    %s97 = sphi 0, %s81
    %s105 = sphi 0, %s107
    %s108 = sphi 0, %s105
    %s109 = sphi 0, %s108
    %s125 = sphi 0, %s109
    %s137 = sphi 0, %s139
    %s140 = sphi 0, %s137
    %s141 = sphi 0, %s140
    %s157 = sphi 0, %s141
  $region4: #{conv1x1_nchw.1} parent=0 // loop_header_branch
    %12 = sbr.rel (%p10) target = $region8
  $region5: #{conv1x1_nchw.1} parent=0 // loop_body
    %s14 = ssub.s32 %s9, 1
    %s15 = ssub.s32 %s9, 2
    %s28 = sadd.s32 1, %s19
    %p29 = scmp.ge.s32.totalorder %s28, 1
    %s30 = scalar_select %p29, 0, %s28
    %s31 = sadd.s32 1, %s18
    %s32 = scalar_select %p29, %s31, %s18
    %p33 = scmp.ge.s32.totalorder %s32, 1
    %s34 = scalar_select %p33, 0, %s32
    %s35 = sadd.s32 1, %s17
    %s36 = scalar_select %p33, %s35, %s17
    %p37 = scmp.ge.s32.totalorder %s36, 1
    %s38 = scalar_select %p37, 0, %s36
    %s39 = sadd.s32 1, %s16
    %s40 = scalar_select %p37, %s39, %s16
    %p41 = scmp.ge.s32.totalorder %s40, 2
    %s42 = scalar_select %p41, 0, %s40
    %s43 = ssub.s32 %s17, %s38
    %s44 = ssub.s32 %s18, %s34
    %s45 = sor.u32 %s43, %s44
    %p46 = scmp.eq.s32.totalorder %s45, 0
    %s48 = sadd.s32 %s47, 1
    %s49 = scalar_select %p46, %s47, %s48
    %p52 = pneg %p46
    %p53 = scmp.eq.s32.totalorder %s9, 1
    %p54 = por %p52, %p53
    %p55 = scmp.ne.s32.totalorder %s47, %s50
    %p56 = scmp.eq.s32.totalorder %s9, 0
    %p57 = por %p55, %p56
    %p58 = scmp.ne.s32.totalorder %s47, %s50
    %p59 = scmp.eq.s32.totalorder %s14, 1
    %p60 = por %p58, %p59
    %p61 = scmp.ne.s32.totalorder %s50, %s51
    %p62 = scmp.eq.s32.totalorder %s14, 0
    %p63 = por %p61, %p62
    %p64 = scmp.ne.s32.totalorder %s50, %s51
    %p65 = scmp.eq.s32.totalorder %s15, 1
    %p66 = por %p64, %p65
    %p68 = scmp.ne.s32.totalorder %s51, %s67
    %p69 = scmp.eq.s32.totalorder %s15, 0
    %p70 = por %p68, %p69
    %s71 = ssub.s32 %s16, %s42
    %s72 = ssub.s32 %s17, %s38
    %s73 = sor.u32 %s71, %s72
    %s74 = ssub.s32 %s19, %s30
    %s75 = sor.u32 %s73, %s74
    %p76 = scmp.eq.s32.totalorder %s75, 0
    %s78 = sadd.s32 %s77, 1
    %s79 = scalar_select %p76, %s77, %s78
    %p82 = pneg %p76
    %p83 = scmp.eq.s32.totalorder %s9, 1
    %p84 = por %p82, %p83
    %p85 = scmp.ne.s32.totalorder %s77, %s80
    %p86 = scmp.eq.s32.totalorder %s9, 0
    %p87 = por %p85, %p86
    %p88 = scmp.ne.s32.totalorder %s77, %s80
    %p89 = scmp.eq.s32.totalorder %s14, 1
    %p90 = por %p88, %p89
    %p91 = scmp.ne.s32.totalorder %s80, %s81
    %p92 = scmp.eq.s32.totalorder %s14, 0
    %p93 = por %p91, %p92
    %p94 = scmp.ne.s32.totalorder %s80, %s81
    %p95 = scmp.eq.s32.totalorder %s15, 1
    %p96 = por %p94, %p95
    %p98 = scmp.ne.s32.totalorder %s81, %s97
    %p99 = scmp.eq.s32.totalorder %s15, 0
    %p100 = por %p98, %p99
    %s101 = ssub.s32 %s17, %s38
    %s102 = ssub.s32 %s18, %s34
    %s103 = sor.u32 %s101, %s102
    %p104 = scmp.eq.s32.totalorder %s103, 0
    %s106 = sadd.s32 %s105, 1
    %s107 = scalar_select %p104, %s105, %s106
    %p110 = pneg %p104
    %p111 = scmp.eq.s32.totalorder %s9, 1
    %p112 = por %p110, %p111
    %p113 = scmp.ne.s32.totalorder %s105, %s108
    %p114 = scmp.eq.s32.totalorder %s9, 0
    %p115 = por %p113, %p114
    %p116 = scmp.ne.s32.totalorder %s105, %s108
    %p117 = scmp.eq.s32.totalorder %s14, 1
    %p118 = por %p116, %p117
    %p119 = scmp.ne.s32.totalorder %s108, %s109
    %p120 = scmp.eq.s32.totalorder %s14, 0
    %p121 = por %p119, %p120
    %p122 = scmp.ne.s32.totalorder %s108, %s109
    %p123 = scmp.eq.s32.totalorder %s15, 1
    %p124 = por %p122, %p123
    %p126 = scmp.ne.s32.totalorder %s109, %s125
    %p127 = scmp.eq.s32.totalorder %s15, 0
    %p128 = por %p126, %p127
    %s129 = ssub.s32 %s16, %s42
    %s130 = ssub.s32 %s17, %s38
    %s131 = sor.u32 %s129, %s130
    %s132 = ssub.s32 %s18, %s34
    %s133 = sor.u32 %s131, %s132
    %s134 = ssub.s32 %s19, %s30
    %s135 = sor.u32 %s133, %s134
    %p136 = scmp.eq.s32.totalorder %s135, 0
    %s138 = sadd.s32 %s137, 1
    %s139 = scalar_select %p136, %s137, %s138
    %p142 = pneg %p136
    %p143 = scmp.eq.s32.totalorder %s9, 1
    %p144 = por %p142, %p143
    %p145 = scmp.ne.s32.totalorder %s137, %s140
    %p146 = scmp.eq.s32.totalorder %s9, 0
    %p147 = por %p145, %p146
    %p148 = scmp.ne.s32.totalorder %s137, %s140
    %p149 = scmp.eq.s32.totalorder %s14, 1
    %p150 = por %p148, %p149
    %p151 = scmp.ne.s32.totalorder %s140, %s141
    %p152 = scmp.eq.s32.totalorder %s14, 0
    %p153 = por %p151, %p152
    %p154 = scmp.ne.s32.totalorder %s140, %s141
    %p155 = scmp.eq.s32.totalorder %s15, 1
    %p156 = por %p154, %p155
    %p158 = scmp.ne.s32.totalorder %s141, %s157
    %p159 = scmp.eq.s32.totalorder %s15, 0
    %p160 = por %p158, %p159
    %p161 = scmp.le.s32.totalorder 1, %s9
    %p162 = scmp.lt.s32.totalorder %s9, 3
    %p163 = pnand %p161, %p162
    %p164 = pneg %p163
    // Predicated region
    $region9: #{conv1x1_nchw.1} parent=5 // pred_check
      _
    $region10: #{conv1x1_nchw.1} parent=5 // pred_check_branch
      %166 = sbr.rel (%p163) target = $region12
    $region11: #{conv1x1_nchw.1} parent=5 // pred_region
      %s167 = ssub.s32 %s9, 1
      // Predicated region
      $region13: #{conv1x1_nchw.1} parent=11 // pred_check
        %p168 = pneg %p63
      $region14: #{conv1x1_nchw.1} parent=11 // pred_check_branch
        %170 = sbr.rel (%p168) target = $region16
      $region15: #{conv1x1_nchw.1} parent=11 // pred_region
        %s171 = smul.u32 8, %s22
        %p172 = scmp.lt.s32.totalorder %s21, 0
        %s173 = scalar_select %p172, %s21, 0
        %p174 = scmp.lt.s32.totalorder %s171, 7
        %s175 = scalar_select %p174, %s171, 7
        %s176 = smul.addr %s173, 8
        %s177 = sadd.s32 %s175, %s176
        %s178 = smul.addr %s177, 4
        %s179 = scalar_lea.vmem %s0, %s178
        %s180 = smul.u32 8, %s22
      $region16: #{conv1x1_nchw.1} parent=11 // pred_fallthru
        _
      // Predicated region
      $region17: #{conv1x1_nchw.1} parent=11 // pred_check
        %p181 = pneg %p121
      $region18: #{conv1x1_nchw.1} parent=11 // pred_check_branch
        %183 = sbr.rel (%p181) target = $region20
      $region19: #{conv1x1_nchw.1} parent=11 // pred_region
        %s184 = smul.u32 8, %s22
        %p185 = scmp.lt.s32.totalorder %s21, 0
        %s186 = scalar_select %p185, %s21, 0
        %p187 = scmp.lt.s32.totalorder %s184, 7
        %s188 = scalar_select %p187, %s184, 7
        %s189 = smul.addr %s186, 8
        %s190 = sadd.s32 %s188, %s189
        %s191 = smul.addr %s190, 8
        %s192 = scalar_lea.vmem %s2, %s191
        %s193 = smul.u32 8, %s22
      $region20: #{conv1x1_nchw.1} parent=11 // pred_fallthru
        _
    $region12: #{conv1x1_nchw.1} parent=5 // pred_fallthru
      _
    %p194 = scmp.lt.s32.totalorder %s9, 2
    // Predicated region
    $region21: #{conv1x1_nchw.1} parent=5 // pred_check
      %p195 = pneg %p194
    $region22: #{conv1x1_nchw.1} parent=5 // pred_check_branch
      %197 = sbr.rel (%p195) target = $region24
    $region23: #{conv1x1_nchw.1} parent=5 // pred_region
      // Predicated region
      $region25: #{conv1x1_nchw.1} parent=23 // pred_check
        %p198 = pneg %p87
      $region26: #{conv1x1_nchw.1} parent=23 // pred_check_branch
        %200 = sbr.rel (%p198) target = $region28
      $region27: #{conv1x1_nchw.1} parent=23 // pred_region
        %s201 = smul.u32 2, %s19
        %p202 = scmp.lt.s32.totalorder %s16, 1
        %s203 = scalar_select %p202, %s16, 1
        %p204 = scmp.lt.s32.totalorder %s17, 0
        %s205 = scalar_select %p204, %s17, 0
        %p206 = scmp.lt.s32.totalorder %s201, 1
        %s207 = scalar_select %p206, %s201, 1
        %s208 = smul.addr %s205, 2
        %s209 = sadd.s32 %s207, %s208
        %s210 = smul.addr %s203, 2
        %s211 = sadd.s32 %s209, %s210
        %s212 = smul.addr %s211, 4
        %s213 = scalar_lea.vmem %s1, %s212
        %s214 = smul.u32 2, %s19
      $region28: #{conv1x1_nchw.1} parent=23 // pred_fallthru
        _
    $region24: #{conv1x1_nchw.1} parent=5 // pred_fallthru
      _
    %p215 = scmp.le.s32.totalorder 1, %s9
    %p216 = scmp.lt.s32.totalorder %s9, 3
    %p217 = pnand %p215, %p216
    %p218 = pneg %p217
    // Predicated region
    $region29: #{conv1x1_nchw.1} parent=5 // pred_check
      _
    $region30: #{conv1x1_nchw.1} parent=5 // pred_check_branch
      %220 = sbr.rel (%p217) target = $region32
    $region31: #{conv1x1_nchw.1} parent=5 // pred_region
      %s221 = ssub.s32 %s9, 1
      %s222 = smul.u32 8, %s22
      %p223 = scmp.lt.s32.totalorder %s21, 0
      %s224 = scalar_select %p223, %s21, 0
      %p225 = scmp.lt.s32.totalorder %s222, 7
      %s226 = scalar_select %p225, %s222, 7
      %s227 = smul.addr %s224, 8
      %s228 = sadd.s32 %s226, %s227
      %s229 = smul.addr %s228, 4
      %s230 = scalar_lea.vmem %s0, %s229
      %p231 = pneg %p63
      %p232 = pneg %p60
      %s233 = smul.u32 2, %s23
      %p234 = scmp.lt.s32.totalorder %s20, 1
      %s235 = scalar_select %p234, %s20, 1
      %p236 = scmp.lt.s32.totalorder %s21, 0
      %s237 = scalar_select %p236, %s21, 0
      %p238 = scmp.lt.s32.totalorder %s233, 1
      %s239 = scalar_select %p238, %s233, 1
      %s240 = smul.addr %s237, 2
      %s241 = sadd.s32 %s239, %s240
      %s242 = smul.addr %s235, 2
      %s243 = sadd.s32 %s241, %s242
      %s244 = smul.addr %s243, 4
      %s245 = scalar_lea.vmem %s1, %s244
      %p246 = pneg %p93
      %p247 = pneg %p90
      %s248 = smul.u32 8, %s22
      %p249 = scmp.lt.s32.totalorder %s21, 0
      %s250 = scalar_select %p249, %s21, 0
      %p251 = scmp.lt.s32.totalorder %s248, 7
      %s252 = scalar_select %p251, %s248, 7
      %s253 = smul.addr %s250, 8
      %s254 = sadd.s32 %s252, %s253
      %s255 = smul.addr %s254, 8
      %s256 = scalar_lea.vmem %s2, %s255
      %p257 = pneg %p121
      %p258 = pneg %p118
      %p259 = pneg %p153
      %p260 = pneg %p150
      %s261 = smul.u32 8, %s22
      %s262 = smul.u32 2, %s23
      %p263 = scmp.lt.s32.totalorder %s20, 1
      %s264 = scalar_select %p263, %s20, 1
      %p265 = scmp.lt.s32.totalorder %s21, 0
      %s266 = scalar_select %p265, %s21, 0
      %p267 = scmp.lt.s32.totalorder %s261, 7
      %s268 = scalar_select %p267, %s261, 7
      %p269 = scmp.lt.s32.totalorder %s262, 1
      %s270 = scalar_select %p269, %s262, 1
      %s271 = smul.addr %s268, 2
      %s272 = sadd.s32 %s270, %s271
      %s273 = smul.addr %s266, 16
      %s274 = sadd.s32 %s272, %s273
      %s275 = smul.addr %s264, 16
      %s276 = sadd.s32 %s274, %s275
      %s277 = smul.addr %s276, 8
      %s278 = scalar_lea.vmem %s3, %s277
      %s279 = smul.u32 8, %s22
      %p280 = scmp.lt.s32.totalorder %s21, 0
      %s281 = scalar_select %p280, %s21, 0
      %p282 = scmp.lt.s32.totalorder %s279, 7
      %s283 = scalar_select %p282, %s279, 7
      %s284 = smul.addr %s281, 8
      %s285 = sadd.s32 %s283, %s284
      %s286 = smul.addr %s285, 4
      %s287 = scalar_lea.vmem %s0, %s286
      %s288 = smul.u32 8, %s22
      %s289 = smul.u32 2, %s23
      %p290 = scmp.lt.s32.totalorder %s20, 1
      %s291 = scalar_select %p290, %s20, 1
      %p292 = scmp.lt.s32.totalorder %s21, 0
      %s293 = scalar_select %p292, %s21, 0
      %p294 = scmp.lt.s32.totalorder %s289, 1
      %s295 = scalar_select %p294, %s289, 1
      %s296 = smul.addr %s293, 2
      %s297 = sadd.s32 %s295, %s296
      %s298 = smul.addr %s291, 2
      %s299 = sadd.s32 %s297, %s298
      %s300 = smul.addr %s299, 4
      %s301 = scalar_lea.vmem %s1, %s300
      %s302 = smul.u32 2, %s23
      %s303 = smul.u32 8, %s22
      %p304 = scmp.lt.s32.totalorder %s21, 0
      %s305 = scalar_select %p304, %s21, 0
      %p306 = scmp.lt.s32.totalorder %s303, 7
      %s307 = scalar_select %p306, %s303, 7
      %s308 = smul.addr %s305, 8
      %s309 = sadd.s32 %s307, %s308
      %s310 = smul.addr %s309, 8
      %s311 = scalar_lea.vmem %s2, %s310
      %s312 = smul.u32 8, %s22
      %s313 = smul.u32 8, %s22
      %s314 = smul.u32 2, %s23
      %p315 = scmp.lt.s32.totalorder %s20, 1
      %s316 = scalar_select %p315, %s20, 1
      %p317 = scmp.lt.s32.totalorder %s21, 0
      %s318 = scalar_select %p317, %s21, 0
      %p319 = scmp.lt.s32.totalorder %s313, 7
      %s320 = scalar_select %p319, %s313, 7
      %p321 = scmp.lt.s32.totalorder %s314, 1
      %s322 = scalar_select %p321, %s314, 1
      %s323 = smul.addr %s320, 2
      %s324 = sadd.s32 %s322, %s323
      %s325 = smul.addr %s318, 16
      %s326 = sadd.s32 %s324, %s325
      %s327 = smul.addr %s316, 16
      %s328 = sadd.s32 %s326, %s327
      %s329 = smul.addr %s328, 8
      %s330 = scalar_lea.vmem %s3, %s329
      %s331 = smul.u32 8, %s22
      %s332 = smul.u32 2, %s23
      %v334 = vld [vmem:[%s287] sm:$0xf]
      %v335 = vld [vmem:[%s287 + $0x4] sm:$0xf]
      %v336 = vld [vmem:[%s287 + $0x8] sm:$0xf]
      %v337 = vld [vmem:[%s287 + $0xc] sm:$0xf]
      %v338 = vld [vmem:[%s287 + $0x10] sm:$0xf]
      %v339 = vld [vmem:[%s287 + $0x14] sm:$0xf]
      %v340 = vld [vmem:[%s287 + $0x18] sm:$0xf]
      %v341 = vld [vmem:[%s287 + $0x1c] sm:$0xf]
      %v342 = vld [vmem:[%s301] sm:$0x77]
      %v344 = vcombine.high %v342, %v342
      %v346 = vpack.c.bf16 %v342, %v342
      %v347 = vpack.c.bf16 %v344, %v344
      %v348 = vld [vmem:[%s311] sm:$0xff]
      %v349 = vld [vmem:[%s311 + $0x8] sm:$0xff]
      %v350 = vld [vmem:[%s311 + $0x10] sm:$0xff]
      %v351 = vld [vmem:[%s311 + $0x18] sm:$0xff]
      %v352 = vld [vmem:[%s311 + $0x20] sm:$0xff]
      %v353 = vld [vmem:[%s311 + $0x28] sm:$0xff]
      %v354 = vld [vmem:[%s311 + $0x30] sm:$0xff]
      %v355 = vld [vmem:[%s311 + $0x38] sm:$0xff]
      %357 = vset.pattern.permute.xlu0 0
      %358 = vperm.xlu0 %357, %v348
      %v359 = vpop.permute.xlu0 %358
      %362 = vset.pattern.permute.xlu0 0
      %363 = vperm.xlu0 %362, %v349
      %v364 = vpop.permute.xlu0 %363
      %367 = vset.pattern.permute.xlu0 0
      %368 = vperm.xlu0 %367, %v350
      %v369 = vpop.permute.xlu0 %368
      %372 = vset.pattern.permute.xlu0 0
      %373 = vperm.xlu0 %372, %v351
      %v374 = vpop.permute.xlu0 %373
      %377 = vset.pattern.permute.xlu0 0
      %378 = vperm.xlu0 %377, %v352
      %v379 = vpop.permute.xlu0 %378
      %382 = vset.pattern.permute.xlu0 0
      %383 = vperm.xlu0 %382, %v353
      %v384 = vpop.permute.xlu0 %383
      %387 = vset.pattern.permute.xlu0 0
      %388 = vperm.xlu0 %387, %v354
      %v389 = vpop.permute.xlu0 %388
      %392 = vset.pattern.permute.xlu0 0
      %393 = vperm.xlu0 %392, %v355
      %v394 = vpop.permute.xlu0 %393
      %v404 = vunpack.c.l.b16 %v334
      %v405 = vunpack.c.l.b16 %v335
      %v406 = vunpack.c.l.b16 %v336
      %v407 = vunpack.c.l.b16 %v337
      %v408 = vunpack.c.l.b16 %v338
      %v409 = vunpack.c.l.b16 %v339
      %v410 = vunpack.c.l.b16 %v340
      %v411 = vunpack.c.l.b16 %v341
      %v412 = vpack.c.b16 %v405, %v404
      %v413 = vpack.c.b16 %v407, %v406
      %v414 = vpack.c.b16 %v409, %v408
      %v415 = vpack.c.b16 %v411, %v410
      %vm416 = vcmask 23552
      %v418 = vsel %vm416, %v412, 0
      %v421 = vsel %vm416, %v413, 0
      %v424 = vsel %vm416, %v414, 0
      %v427 = vsel %vm416, %v415, 0
      %vm429 = vcmask 1040384
      %vm430 = vcmask 1041408
      %v431 = vsel %vm429, 4294967295, 65535
      %v432 = vsel %vm430, %v431, 0
      %v434 = vand.u32 %v346, %v432
      %v437 = vand.u32 %v347, %v432
      %439 = vmatprep.subr.bf16.mxu0 %v437
      %440 = vmatpush1.bf16.msra.mxu0 %v434
      %441 = vmatprep.subr.bf16.mxu0 0
      %442 = vmatpush1.bf16.msra.mxu0 0
      %443 = vmatprep.subr.bf16.mxu0 0
      %444 = vmatpush1.bf16.msra.mxu0 0
      %445 = vmatprep.subr.bf16.mxu0 0
      %446 = vmatpush1.bf16.msra.mxu0 0
      %447 = vmatprep.subr.bf16.mxu0 0
      %448 = vmatpush1.bf16.msra.mxu0 0
      %449 = vmatprep.subr.bf16.mxu0 0
      %450 = vmatpush1.bf16.msra.mxu0 0
      %451 = vmatprep.subr.bf16.mxu0 0
      %452 = vmatpush1.bf16.msra.mxu0 0
      %453 = vmatprep.subr.bf16.mxu0 0
      %454 = vmatpush1.bf16.msra.mxu0 0
      %455 = vmatprep.subr.bf16.mxu0 0
      %456 = vmatpush1.bf16.msra.mxu0 0
      %457 = vmatprep.subr.bf16.mxu0 0
      %458 = vmatpush1.bf16.msra.mxu0 0
      %459 = vmatprep.subr.bf16.mxu0 0
      %460 = vmatpush1.bf16.msra.mxu0 0
      %461 = vmatprep.subr.bf16.mxu0 0
      %462 = vmatpush1.bf16.msra.mxu0 0
      %463 = vmatprep.subr.bf16.mxu0 0
      %464 = vmatpush1.bf16.msra.mxu0 0
      %465 = vmatprep.subr.bf16.mxu0 0
      %466 = vmatpush1.bf16.msra.mxu0 0
      %467 = vmatprep.subr.bf16.mxu0 0
      %468 = vmatpush1.bf16.msra.mxu0 0
      %469 = vmatprep.subr.bf16.mxu0 0
      %470 = vmatpush1.bf16.msra.mxu0 0
      %471 = vmatprep.mubr.bf16.mxu0 0
      %472 = vmatmul.mubr.bf16.gmra.mrb[0].mxu0 %v418
      %v473 = vpop.f32.mrb[0].mxu0
      %v474 = vadd.f32 %v359, %v473
      %v475 = vpop.f32.mrb[0].mxu0
      %v476 = vadd.f32 %v359, %v475
      %v477 = vpop.f32.mrb[0].mxu0
      %v478 = vadd.f32 %v364, %v477
      %v479 = vpop.f32.mrb[0].mxu0
      %v480 = vadd.f32 %v364, %v479
      %481 = vmatprep.mubr.bf16.mxu0 0
      %482 = vmatmul.mubr.bf16.gmra.mrb[0].mxu0 %v421
      %v483 = vpop.f32.mrb[0].mxu0
      %v484 = vadd.f32 %v369, %v483
      %v485 = vpop.f32.mrb[0].mxu0
      %v486 = vadd.f32 %v369, %v485
      %v487 = vpop.f32.mrb[0].mxu0
      %v488 = vadd.f32 %v374, %v487
      %v489 = vpop.f32.mrb[0].mxu0
      %v490 = vadd.f32 %v374, %v489
      %491 = vmatprep.mubr.bf16.mxu0 0
      %492 = vmatmul.mubr.bf16.gmra.mrb[0].mxu0 %v424
      %v493 = vpop.f32.mrb[0].mxu0
      %v494 = vadd.f32 %v379, %v493
      %v495 = vpop.f32.mrb[0].mxu0
      %v496 = vadd.f32 %v379, %v495
      %v497 = vpop.f32.mrb[0].mxu0
      %v498 = vadd.f32 %v384, %v497
      %v499 = vpop.f32.mrb[0].mxu0
      %v500 = vadd.f32 %v384, %v499
      %501 = vmatprep.mubr.bf16.mxu0 0
      %502 = vmatmul.mubr.bf16.gmra.mrb[0].mxu0 %v427
      %v503 = vpop.f32.mrb[0].mxu0
      %v504 = vadd.f32 %v389, %v503
      %v505 = vpop.f32.mrb[0].mxu0
      %v506 = vadd.f32 %v389, %v505
      %v507 = vpop.f32.mrb[0].mxu0
      %v508 = vadd.f32 %v394, %v507
      %v509 = vpop.f32.mrb[0].mxu0
      %v510 = vadd.f32 %v394, %v509
      %511 = vdwg.mxu0
      %512 = vst [vmem:[%s330] sm:$0xff] %v474
      %513 = vst [vmem:[%s330 + $0x8] sm:$0xff] %v476
      %514 = vst [vmem:[%s330 + $0x10] sm:$0xff] %v478
      %515 = vst [vmem:[%s330 + $0x18] sm:$0xff] %v480
      %516 = vst [vmem:[%s330 + $0x20] sm:$0xff] %v484
      %517 = vst [vmem:[%s330 + $0x28] sm:$0xff] %v486
      %518 = vst [vmem:[%s330 + $0x30] sm:$0xff] %v488
      %519 = vst [vmem:[%s330 + $0x38] sm:$0xff] %v490
      %520 = vst [vmem:[%s330 + $0x40] sm:$0xff] %v494
      %521 = vst [vmem:[%s330 + $0x48] sm:$0xff] %v496
      %522 = vst [vmem:[%s330 + $0x50] sm:$0xff] %v498
      %523 = vst [vmem:[%s330 + $0x58] sm:$0xff] %v500
      %524 = vst [vmem:[%s330 + $0x60] sm:$0xff] %v504
      %525 = vst [vmem:[%s330 + $0x68] sm:$0xff] %v506
      %526 = vst [vmem:[%s330 + $0x70] sm:$0xff] %v508
      %527 = vst [vmem:[%s330 + $0x78] sm:$0xff] %v510
      %s528 = smul.u32 8, %s22
      %s529 = smul.u32 2, %s23
      %p530 = scmp.lt.s32.totalorder %s20, 1
      %s531 = scalar_select %p530, %s20, 1
      %p532 = scmp.lt.s32.totalorder %s21, 0
      %s533 = scalar_select %p532, %s21, 0
      %p534 = scmp.lt.s32.totalorder %s528, 7
      %s535 = scalar_select %p534, %s528, 7
      %p536 = scmp.lt.s32.totalorder %s529, 1
      %s537 = scalar_select %p536, %s529, 1
      %s538 = smul.addr %s535, 2
      %s539 = sadd.s32 %s537, %s538
      %s540 = smul.addr %s533, 16
      %s541 = sadd.s32 %s539, %s540
      %s542 = smul.addr %s531, 16
      %s543 = sadd.s32 %s541, %s542
      %s544 = smul.addr %s543, 8
      %s545 = scalar_lea.vmem %s3, %s544
      // Predicated region
      $region33: #{conv1x1_nchw.1} parent=31 // pred_check
        %p546 = pneg %p150
      $region34: #{conv1x1_nchw.1} parent=31 // pred_check_branch
        %548 = sbr.rel (%p546) target = $region36
      $region35: #{conv1x1_nchw.1} parent=31 // pred_region
        %s549 = smul.u32 8, %s22
        %s550 = smul.u32 2, %s23
      $region36: #{conv1x1_nchw.1} parent=31 // pred_fallthru
        _
    $region32: #{conv1x1_nchw.1} parent=5 // pred_fallthru
      _
    %p551 = scmp.le.s32.totalorder 2, %s9
    // Predicated region
    $region37: #{conv1x1_nchw.1} parent=5 // pred_check
      %p552 = pneg %p551
    $region38: #{conv1x1_nchw.1} parent=5 // pred_check_branch
      %554 = sbr.rel (%p552) target = $region40
    $region39: #{conv1x1_nchw.1} parent=5 // pred_region
      %s555 = ssub.s32 %s9, 2
      // Predicated region
      $region41: #{conv1x1_nchw.1} parent=39 // pred_check
        %p556 = pneg %p156
      $region42: #{conv1x1_nchw.1} parent=39 // pred_check_branch
        %558 = sbr.rel (%p556) target = $region44
      $region43: #{conv1x1_nchw.1} parent=39 // pred_region
        %s559 = smul.u32 8, %s26
        %s560 = smul.u32 2, %s27
        %p561 = scmp.lt.s32.totalorder %s24, 1
        %s562 = scalar_select %p561, %s24, 1
        %p563 = scmp.lt.s32.totalorder %s25, 0
        %s564 = scalar_select %p563, %s25, 0
        %p565 = scmp.lt.s32.totalorder %s559, 7
        %s566 = scalar_select %p565, %s559, 7
        %p567 = scmp.lt.s32.totalorder %s560, 1
        %s568 = scalar_select %p567, %s560, 1
        %s569 = smul.addr %s566, 2
        %s570 = sadd.s32 %s568, %s569
        %s571 = smul.addr %s564, 16
        %s572 = sadd.s32 %s570, %s571
        %s573 = smul.addr %s562, 16
        %s574 = sadd.s32 %s572, %s573
        %s575 = smul.addr %s574, 8
        %s576 = scalar_lea.vmem %s3, %s575
      $region44: #{conv1x1_nchw.1} parent=39 // pred_fallthru
        _
    $region40: #{conv1x1_nchw.1} parent=5 // pred_fallthru
      _
  $region6: #{conv1x1_nchw.1} parent=0 // loop_footer
    %s13 = sadd.s32 1, %s9
  $region7: #{conv1x1_nchw.1} parent=0 // loop_footer_branch
    %8 = sbr.rel target = $region3
  $region8: #{conv1x1_nchw.1} parent=0 // loop_exit
    _

</llo_original>
